<compile_context>
chip_gen: v5e
topology: v5e:2x2
jax: 0.10.0
libtpu: 0.0.40
codegen_flags: <defaults>
</compile_context>

<pallas_src>
import jax
import jax.numpy as jnp
from jax.experimental import pallas as pl
from jax.experimental.pallas import tpu as pltpu


def _qsa_fused_kernel(q_ref, w1_ref, bw_ref, b2_ref, o_ref):
    """FC1 -> tanh -> FC2 -> softmax over batch -> bug-compatible relayout -> weighted sum.

    q_ref : [N, H]  (N = batch * q_len, batch-major flat rows)   VMEM
    w1_ref: [H, H]                                               VMEM
    bw_ref: [2, H]  (row 0 = b1, row 1 = W2)                     VMEM
    b2_ref: [1, 1]                                               SMEM
    o_ref : [B, H]  output                                       VMEM
    """
    N, H = q_ref.shape
    B, _ = o_ref.shape
    L = N // B
    f32 = jnp.float32

    q = q_ref[...]                              # [N, H]
    b1 = bw_ref[0:1, :]                         # [1, H]
    w2 = bw_ref[1:2, :]                         # [1, H]
    b2 = b2_ref[0, 0]                           # scalar (SMEM)

    # ---- FC1 -> tanh -> FC2 : one clean 2-D MXU matmul + a lane reduction ----------------
    a1 = jnp.tanh(jnp.dot(q, w1_ref[...], preferred_element_type=f32) + b1)   # [N, H]
    att = jnp.sum(a1 * w2, axis=-1, keepdims=True) + b2                        # [N, 1]
    # att[k] = atten[b = k // L, l = k % L]

    # ---- softmax over the batch axis, per question position l = k % L --------------------
    # Group-membership mask g[k, l] = (k % L == l), built from 2-D iotas (no vector int
    # div/mod, no reshape). Static Python unroll over the (small) batch.
    kc = jax.lax.broadcasted_iota(jnp.int32, (N, 1), 0)
    lr = jax.lax.broadcasted_iota(jnp.int32, (1, L), 1)
    diff = kc - lr                                                             # [N, L]
    g = diff == 0
    for b in range(1, B):
        g = g | (diff == b * L)
    gf = jnp.where(g, f32(1), f32(0))                                          # [N, L]

    att_full = jnp.broadcast_to(att, (N, L))
    m = jnp.max(jnp.where(g, att_full, f32(-jnp.inf)), axis=0, keepdims=True)  # [1, L] per-l max
    mg = jnp.sum(gf * m, axis=1, keepdims=True)                                # [N, 1] = m[k % L]
    e = jnp.exp(att - mg)                                                      # [N, 1]
    denom = jnp.sum(gf * e, axis=0, keepdims=True)                             # [1, L]
    dg = jnp.sum(gf * denom, axis=1, keepdims=True)                            # [N, 1] = denom[k % L]
    # EUP approximate reciprocal seed + one Newton step (full f32 accuracy, VALU cost ~nil).
    inv = pl.reciprocal(dg, approx=True)
    inv = inv * (f32(2) - dg * inv)
    s_flat = e * inv                             # [N, 1] = row-major flatten of sm[B, L]

    # ---- bug-compatible relayout: weight = softmax(atten.t(), 1).view(B, 1, L) ------------
    # weight_flat[k'] = s_flat[(k' % B) * L + (k' // B)]  ==  perm @ s_flat, with `perm` a 0/1
    # permutation matrix built from iotas + step functions (avoids an unaligned in-kernel
    # transpose+reshape).
    jrow = jax.lax.broadcasted_iota(jnp.int32, (1, N), 1)                      # column index j
    kdiv = jnp.zeros((N, 1), jnp.int32)                                        # k' // B
    for t in range(1, L):
        kdiv = kdiv + jnp.where(kc >= t * B, 1, 0)
    kmod = kc - B * kdiv                                                       # k' % B
    jdiv = jnp.zeros((1, N), jnp.int32)                                        # j // L
    for t in range(1, B):
        jdiv = jdiv + jnp.where(jrow >= t * L, 1, 0)
    jmod = jrow - L * jdiv                                                     # j % L
    perm = jnp.where((kmod == jdiv) & (kdiv == jmod), f32(1), f32(0))          # [N, N]
    w_flat = jnp.dot(perm, s_flat, preferred_element_type=f32)                 # [N, 1]

    # ---- weighted sum (torch.bmm): out[b] = sum of that batch's L weighted rows -----------
    bc = jax.lax.broadcasted_iota(jnp.int32, (B, 1), 0)
    sel = jnp.where((jrow >= bc * L) & (jrow < (bc + 1) * L), f32(1), f32(0))  # [B, N]
    # TODO(synk): nn.Dropout is identity at inference; no kernel work needed.
    o_ref[...] = jnp.dot(sel, w_flat * q, preferred_element_type=f32)          # [B, H]


@jax.jit
def question_self_attention(ques_feat, w1, b1, w2, b2):
    """Fused QuestionSelfAttention forward (eval mode). Returns [batch, num_hid]."""
    B, L, H = ques_feat.shape
    N = B * L

    q_flat = ques_feat.reshape(N, H).astype(jnp.float32)     # free row-major view
    bw = jnp.concatenate([jnp.reshape(b1, (1, H)).astype(jnp.float32),
                          jnp.reshape(w2, (1, H)).astype(jnp.float32)], axis=0)   # [2, H]
    b2s = jnp.reshape(jnp.asarray(b2, jnp.float32), (1, 1))

    vmem = pl.BlockSpec(memory_space=pltpu.MemorySpace.VMEM)
    smem = pl.BlockSpec(memory_space=pltpu.MemorySpace.SMEM)

    return pl.pallas_call(
        _qsa_fused_kernel,
        out_shape=jax.ShapeDtypeStruct((B, H), jnp.float32),
        in_specs=[vmem, vmem, vmem, smem],
        out_specs=vmem,
    )(q_flat, w1.astype(jnp.float32), bw, b2s)


if __name__ == "__main__":
    B, L, H = 2, 14, 32   # batch=2, q_len=14 (per the module docstring), num_hid=32

    key = jax.random.PRNGKey(0)
    kq, k1, kb1, k2, kb2 = jax.random.split(key, 5)
    ques_feat = jax.random.normal(kq, (B, L, H), jnp.float32)
    # weight_norm(Linear) at inference is just an effective weight matrix.
    w1 = jax.random.normal(k1, (H, H), jnp.float32) * 0.1    # FC1 weight, [H_in, H_out]
    b1 = jax.random.normal(kb1, (1, H), jnp.float32) * 0.1
    w2 = jax.random.normal(k2, (1, H), jnp.float32) * 0.1    # FC2 weight, [1, H]
    b2 = jax.random.normal(kb2, (1, 1), jnp.float32) * 0.1

    out = jax.block_until_ready(question_self_attention(ques_feat, w1, b1, w2, b2))

    # Pure-JAX reference reproducing the PyTorch forward (eval mode) exactly.
    x = ques_feat.reshape(-1, H)
    a1 = jnp.tanh(x @ w1 + b1)                               # W1_self_att_q + tanh
    att = (a1 @ w2.T + b2).reshape(B, L)                     # W2_self_att_q
    smT = jax.nn.softmax(att.T, axis=1)                      # softmax(atten.t(), dim=1)
    wgt = smT.reshape(B, 1, L)                               # .view(-1, 1, q_len)
    ref = jnp.einsum('bol,blh->boh', wgt, ques_feat).reshape(B, H)

    assert out.shape == (B, H)
    # Tight tolerance: the EUP approximate reciprocal is refined with one Newton step.
    assert jnp.allclose(out, ref, atol=1e-4, rtol=1e-4), float(jnp.max(jnp.abs(out - ref)))

    print("KERNEL_OK")
</pallas_src>

<mosaic_0001>
module attributes {stable_mosaic.version = 11 : i64} {
  func.func @_qsa_fused_kernel(%arg0: memref<28x32xf32, #tpu.memory_space<vmem>>, %arg1: memref<32x32xf32, #tpu.memory_space<vmem>>, %arg2: memref<2x32xf32, #tpu.memory_space<vmem>>, %arg3: memref<1x1xf32, #tpu.memory_space<smem>>, %arg4: memref<2x32xf32, #tpu.memory_space<vmem>>) attributes {dimension_semantics = [], scalar_prefetch = 0 : i64, scratch_operands = 0 : i64, tpu.core_type = #tpu.core_type<tc>} {
    %c0 = arith.constant 0 : index
    %c0_0 = arith.constant 0 : index
    %0 = vector.load %arg0[%c0, %c0_0] : memref<28x32xf32, #tpu.memory_space<vmem>>, vector<28x32xf32>
    %c0_1 = arith.constant 0 : index
    %c0_2 = arith.constant 0 : index
    %1 = vector.load %arg2[%c0_1, %c0_2] : memref<2x32xf32, #tpu.memory_space<vmem>>, vector<1x32xf32>
    %c1 = arith.constant 1 : index
    %c0_3 = arith.constant 0 : index
    %2 = vector.load %arg2[%c1, %c0_3] : memref<2x32xf32, #tpu.memory_space<vmem>>, vector<1x32xf32>
    %c0_4 = arith.constant 0 : index
    %c0_5 = arith.constant 0 : index
    %3 = memref.load %arg3[%c0_4, %c0_5] : memref<1x1xf32, #tpu.memory_space<smem>>
    %c0_6 = arith.constant 0 : index
    %c0_7 = arith.constant 0 : index
    %4 = vector.load %arg1[%c0_6, %c0_7] : memref<32x32xf32, #tpu.memory_space<vmem>>, vector<32x32xf32>
    %cst = arith.constant dense<0.000000e+00> : vector<28x32xf32>
    %5 = tpu.matmul %0, %4, %cst {dimension_numbers = #tpu.dot_dimension_numbers<[1], [0], [0], [1], [0, 0, 1, 1], [], []>} : vector<28x32xf32>, vector<32x32xf32>, vector<28x32xf32> -> vector<28x32xf32>
    %6 = vector.broadcast %1 : vector<1x32xf32> to vector<28x32xf32>
    %7 = arith.addf %5, %6 : vector<28x32xf32>
    %8 = math.tanh %7 : vector<28x32xf32>
    %9 = vector.broadcast %2 : vector<1x32xf32> to vector<28x32xf32>
    %10 = arith.mulf %8, %9 : vector<28x32xf32>
    %cst_8 = arith.constant dense<0.000000e+00> : vector<28xf32>
    %11 = vector.multi_reduction <add>, %10, %cst_8 [1] : vector<28x32xf32> to vector<28xf32>
    %12 = vector.shape_cast %11 : vector<28xf32> to vector<28x1xf32>
    %13 = vector.broadcast %3 : f32 to vector<28x1xf32>
    %14 = arith.addf %12, %13 : vector<28x1xf32>
    %15 = tpu.iota {dimensions = array<i32: 0>} : vector<28x1xi32>
    %16 = tpu.iota {dimensions = array<i32: 1>} : vector<1x14xi32>
    %17 = vector.broadcast %15 : vector<28x1xi32> to vector<28x14xi32>
    %18 = vector.broadcast %16 : vector<1x14xi32> to vector<28x14xi32>
    %19 = arith.subi %17, %18 : vector<28x14xi32>
    %c0_i32 = arith.constant 0 : i32
    %20 = vector.broadcast %c0_i32 : i32 to vector<28x14xi32>
    %21 = arith.cmpi eq, %19, %20 : vector<28x14xi32>
    %c14_i32 = arith.constant 14 : i32
    %22 = vector.broadcast %c14_i32 : i32 to vector<28x14xi32>
    %23 = arith.cmpi eq, %19, %22 : vector<28x14xi32>
    %24 = arith.ori %21, %23 : vector<28x14xi1>
    %cst_9 = arith.constant 1.000000e+00 : f32
    %cst_10 = arith.constant 0.000000e+00 : f32
    %25 = vector.broadcast %cst_9 : f32 to vector<28x14xf32>
    %26 = vector.broadcast %cst_10 : f32 to vector<28x14xf32>
    %27 = arith.select %24, %25, %26 : vector<28x14xi1>, vector<28x14xf32>
    %28 = vector.shape_cast %14 : vector<28x1xf32> to vector<28x1xf32>
    %29 = vector.broadcast %28 : vector<28x1xf32> to vector<28x14xf32>
    %cst_11 = arith.constant 0xFF800000 : f32
    %30 = vector.broadcast %cst_11 : f32 to vector<28x14xf32>
    %31 = arith.select %24, %29, %30 : vector<28x14xi1>, vector<28x14xf32>
    %cst_12 = arith.constant dense<0xFF800000> : vector<14xf32>
    %32 = vector.multi_reduction <maximumf>, %31, %cst_12 [0] : vector<28x14xf32> to vector<14xf32>
    %33 = vector.shape_cast %32 : vector<14xf32> to vector<1x14xf32>
    %34 = vector.broadcast %33 : vector<1x14xf32> to vector<28x14xf32>
    %35 = arith.mulf %27, %34 : vector<28x14xf32>
    %cst_13 = arith.constant dense<0.000000e+00> : vector<28xf32>
    %36 = vector.multi_reduction <add>, %35, %cst_13 [1] : vector<28x14xf32> to vector<28xf32>
    %37 = vector.shape_cast %36 : vector<28xf32> to vector<28x1xf32>
    %38 = arith.subf %14, %37 : vector<28x1xf32>
    %39 = math.exp %38 : vector<28x1xf32>
    %40 = vector.broadcast %39 : vector<28x1xf32> to vector<28x14xf32>
    %41 = arith.mulf %27, %40 : vector<28x14xf32>
    %cst_14 = arith.constant dense<0.000000e+00> : vector<14xf32>
    %42 = vector.multi_reduction <add>, %41, %cst_14 [0] : vector<28x14xf32> to vector<14xf32>
    %43 = vector.shape_cast %42 : vector<14xf32> to vector<1x14xf32>
    %44 = vector.broadcast %43 : vector<1x14xf32> to vector<28x14xf32>
    %45 = arith.mulf %27, %44 : vector<28x14xf32>
    %cst_15 = arith.constant dense<0.000000e+00> : vector<28xf32>
    %46 = vector.multi_reduction <add>, %45, %cst_15 [1] : vector<28x14xf32> to vector<28xf32>
    %47 = vector.shape_cast %46 : vector<28xf32> to vector<28x1xf32>
    %48 = tpu.reciprocal %47 {approx = true} : vector<28x1xf32> -> vector<28x1xf32>
    %49 = arith.mulf %47, %48 : vector<28x1xf32>
    %cst_16 = arith.constant 2.000000e+00 : f32
    %50 = vector.broadcast %cst_16 : f32 to vector<28x1xf32>
    %51 = arith.subf %50, %49 : vector<28x1xf32>
    %52 = arith.mulf %48, %51 : vector<28x1xf32>
    %53 = arith.mulf %39, %52 : vector<28x1xf32>
    %54 = tpu.iota {dimensions = array<i32: 1>} : vector<1x28xi32>
    %c0_i32_17 = arith.constant 0 : i32
    %55 = vector.broadcast %c0_i32_17 : i32 to vector<28x1xi32>
    %c2_i32 = arith.constant 2 : i32
    %56 = vector.broadcast %c2_i32 : i32 to vector<28x1xi32>
    %57 = arith.cmpi sge, %15, %56 : vector<28x1xi32>
    %c1_i32 = arith.constant 1 : i32
    %c0_i32_18 = arith.constant 0 : i32
    %58 = vector.broadcast %c1_i32 : i32 to vector<28x1xi32>
    %59 = vector.broadcast %c0_i32_18 : i32 to vector<28x1xi32>
    %60 = arith.select %57, %58, %59 : vector<28x1xi1>, vector<28x1xi32>
    %61 = arith.addi %55, %60 : vector<28x1xi32>
    %c4_i32 = arith.constant 4 : i32
    %62 = vector.broadcast %c4_i32 : i32 to vector<28x1xi32>
    %63 = arith.cmpi sge, %15, %62 : vector<28x1xi32>
    %c1_i32_19 = arith.constant 1 : i32
    %c0_i32_20 = arith.constant 0 : i32
    %64 = vector.broadcast %c1_i32_19 : i32 to vector<28x1xi32>
    %65 = vector.broadcast %c0_i32_20 : i32 to vector<28x1xi32>
    %66 = arith.select %63, %64, %65 : vector<28x1xi1>, vector<28x1xi32>
    %67 = arith.addi %61, %66 : vector<28x1xi32>
    %c6_i32 = arith.constant 6 : i32
    %68 = vector.broadcast %c6_i32 : i32 to vector<28x1xi32>
    %69 = arith.cmpi sge, %15, %68 : vector<28x1xi32>
    %c1_i32_21 = arith.constant 1 : i32
    %c0_i32_22 = arith.constant 0 : i32
    %70 = vector.broadcast %c1_i32_21 : i32 to vector<28x1xi32>
    %71 = vector.broadcast %c0_i32_22 : i32 to vector<28x1xi32>
    %72 = arith.select %69, %70, %71 : vector<28x1xi1>, vector<28x1xi32>
    %73 = arith.addi %67, %72 : vector<28x1xi32>
    %c8_i32 = arith.constant 8 : i32
    %74 = vector.broadcast %c8_i32 : i32 to vector<28x1xi32>
    %75 = arith.cmpi sge, %15, %74 : vector<28x1xi32>
    %c1_i32_23 = arith.constant 1 : i32
    %c0_i32_24 = arith.constant 0 : i32
    %76 = vector.broadcast %c1_i32_23 : i32 to vector<28x1xi32>
    %77 = vector.broadcast %c0_i32_24 : i32 to vector<28x1xi32>
    %78 = arith.select %75, %76, %77 : vector<28x1xi1>, vector<28x1xi32>
    %79 = arith.addi %73, %78 : vector<28x1xi32>
    %c10_i32 = arith.constant 10 : i32
    %80 = vector.broadcast %c10_i32 : i32 to vector<28x1xi32>
    %81 = arith.cmpi sge, %15, %80 : vector<28x1xi32>
    %c1_i32_25 = arith.constant 1 : i32
    %c0_i32_26 = arith.constant 0 : i32
    %82 = vector.broadcast %c1_i32_25 : i32 to vector<28x1xi32>
    %83 = vector.broadcast %c0_i32_26 : i32 to vector<28x1xi32>
    %84 = arith.select %81, %82, %83 : vector<28x1xi1>, vector<28x1xi32>
    %85 = arith.addi %79, %84 : vector<28x1xi32>
    %c12_i32 = arith.constant 12 : i32
    %86 = vector.broadcast %c12_i32 : i32 to vector<28x1xi32>
    %87 = arith.cmpi sge, %15, %86 : vector<28x1xi32>
    %c1_i32_27 = arith.constant 1 : i32
    %c0_i32_28 = arith.constant 0 : i32
    %88 = vector.broadcast %c1_i32_27 : i32 to vector<28x1xi32>
    %89 = vector.broadcast %c0_i32_28 : i32 to vector<28x1xi32>
    %90 = arith.select %87, %88, %89 : vector<28x1xi1>, vector<28x1xi32>
    %91 = arith.addi %85, %90 : vector<28x1xi32>
    %c14_i32_29 = arith.constant 14 : i32
    %92 = vector.broadcast %c14_i32_29 : i32 to vector<28x1xi32>
    %93 = arith.cmpi sge, %15, %92 : vector<28x1xi32>
    %c1_i32_30 = arith.constant 1 : i32
    %c0_i32_31 = arith.constant 0 : i32
    %94 = vector.broadcast %c1_i32_30 : i32 to vector<28x1xi32>
    %95 = vector.broadcast %c0_i32_31 : i32 to vector<28x1xi32>
    %96 = arith.select %93, %94, %95 : vector<28x1xi1>, vector<28x1xi32>
    %97 = arith.addi %91, %96 : vector<28x1xi32>
    %c16_i32 = arith.constant 16 : i32
    %98 = vector.broadcast %c16_i32 : i32 to vector<28x1xi32>
    %99 = arith.cmpi sge, %15, %98 : vector<28x1xi32>
    %c1_i32_32 = arith.constant 1 : i32
    %c0_i32_33 = arith.constant 0 : i32
    %100 = vector.broadcast %c1_i32_32 : i32 to vector<28x1xi32>
    %101 = vector.broadcast %c0_i32_33 : i32 to vector<28x1xi32>
    %102 = arith.select %99, %100, %101 : vector<28x1xi1>, vector<28x1xi32>
    %103 = arith.addi %97, %102 : vector<28x1xi32>
    %c18_i32 = arith.constant 18 : i32
    %104 = vector.broadcast %c18_i32 : i32 to vector<28x1xi32>
    %105 = arith.cmpi sge, %15, %104 : vector<28x1xi32>
    %c1_i32_34 = arith.constant 1 : i32
    %c0_i32_35 = arith.constant 0 : i32
    %106 = vector.broadcast %c1_i32_34 : i32 to vector<28x1xi32>
    %107 = vector.broadcast %c0_i32_35 : i32 to vector<28x1xi32>
    %108 = arith.select %105, %106, %107 : vector<28x1xi1>, vector<28x1xi32>
    %109 = arith.addi %103, %108 : vector<28x1xi32>
    %c20_i32 = arith.constant 20 : i32
    %110 = vector.broadcast %c20_i32 : i32 to vector<28x1xi32>
    %111 = arith.cmpi sge, %15, %110 : vector<28x1xi32>
    %c1_i32_36 = arith.constant 1 : i32
    %c0_i32_37 = arith.constant 0 : i32
    %112 = vector.broadcast %c1_i32_36 : i32 to vector<28x1xi32>
    %113 = vector.broadcast %c0_i32_37 : i32 to vector<28x1xi32>
    %114 = arith.select %111, %112, %113 : vector<28x1xi1>, vector<28x1xi32>
    %115 = arith.addi %109, %114 : vector<28x1xi32>
    %c22_i32 = arith.constant 22 : i32
    %116 = vector.broadcast %c22_i32 : i32 to vector<28x1xi32>
    %117 = arith.cmpi sge, %15, %116 : vector<28x1xi32>
    %c1_i32_38 = arith.constant 1 : i32
    %c0_i32_39 = arith.constant 0 : i32
    %118 = vector.broadcast %c1_i32_38 : i32 to vector<28x1xi32>
    %119 = vector.broadcast %c0_i32_39 : i32 to vector<28x1xi32>
    %120 = arith.select %117, %118, %119 : vector<28x1xi1>, vector<28x1xi32>
    %121 = arith.addi %115, %120 : vector<28x1xi32>
    %c24_i32 = arith.constant 24 : i32
    %122 = vector.broadcast %c24_i32 : i32 to vector<28x1xi32>
    %123 = arith.cmpi sge, %15, %122 : vector<28x1xi32>
    %c1_i32_40 = arith.constant 1 : i32
    %c0_i32_41 = arith.constant 0 : i32
    %124 = vector.broadcast %c1_i32_40 : i32 to vector<28x1xi32>
    %125 = vector.broadcast %c0_i32_41 : i32 to vector<28x1xi32>
    %126 = arith.select %123, %124, %125 : vector<28x1xi1>, vector<28x1xi32>
    %127 = arith.addi %121, %126 : vector<28x1xi32>
    %c26_i32 = arith.constant 26 : i32
    %128 = vector.broadcast %c26_i32 : i32 to vector<28x1xi32>
    %129 = arith.cmpi sge, %15, %128 : vector<28x1xi32>
    %c1_i32_42 = arith.constant 1 : i32
    %c0_i32_43 = arith.constant 0 : i32
    %130 = vector.broadcast %c1_i32_42 : i32 to vector<28x1xi32>
    %131 = vector.broadcast %c0_i32_43 : i32 to vector<28x1xi32>
    %132 = arith.select %129, %130, %131 : vector<28x1xi1>, vector<28x1xi32>
    %133 = arith.addi %127, %132 : vector<28x1xi32>
    %c2_i32_44 = arith.constant 2 : i32
    %134 = vector.broadcast %c2_i32_44 : i32 to vector<28x1xi32>
    %135 = arith.muli %134, %133 : vector<28x1xi32>
    %136 = arith.subi %15, %135 : vector<28x1xi32>
    %c0_i32_45 = arith.constant 0 : i32
    %137 = vector.broadcast %c0_i32_45 : i32 to vector<1x28xi32>
    %c14_i32_46 = arith.constant 14 : i32
    %138 = vector.broadcast %c14_i32_46 : i32 to vector<1x28xi32>
    %139 = arith.cmpi sge, %54, %138 : vector<1x28xi32>
    %c1_i32_47 = arith.constant 1 : i32
    %c0_i32_48 = arith.constant 0 : i32
    %140 = vector.broadcast %c1_i32_47 : i32 to vector<1x28xi32>
    %141 = vector.broadcast %c0_i32_48 : i32 to vector<1x28xi32>
    %142 = arith.select %139, %140, %141 : vector<1x28xi1>, vector<1x28xi32>
    %143 = arith.addi %137, %142 : vector<1x28xi32>
    %c14_i32_49 = arith.constant 14 : i32
    %144 = vector.broadcast %c14_i32_49 : i32 to vector<1x28xi32>
    %145 = arith.muli %144, %143 : vector<1x28xi32>
    %146 = arith.subi %54, %145 : vector<1x28xi32>
    %147 = vector.broadcast %136 : vector<28x1xi32> to vector<28x28xi32>
    %148 = vector.broadcast %143 : vector<1x28xi32> to vector<28x28xi32>
    %149 = arith.cmpi eq, %147, %148 : vector<28x28xi32>
    %150 = vector.broadcast %133 : vector<28x1xi32> to vector<28x28xi32>
    %151 = vector.broadcast %146 : vector<1x28xi32> to vector<28x28xi32>
    %152 = arith.cmpi eq, %150, %151 : vector<28x28xi32>
    %153 = arith.andi %149, %152 : vector<28x28xi1>
    %cst_50 = arith.constant 1.000000e+00 : f32
    %cst_51 = arith.constant 0.000000e+00 : f32
    %154 = vector.broadcast %cst_50 : f32 to vector<28x28xf32>
    %155 = vector.broadcast %cst_51 : f32 to vector<28x28xf32>
    %156 = arith.select %153, %154, %155 : vector<28x28xi1>, vector<28x28xf32>
    %cst_52 = arith.constant dense<0.000000e+00> : vector<28x1xf32>
    %157 = tpu.matmul %156, %53, %cst_52 {dimension_numbers = #tpu.dot_dimension_numbers<[1], [0], [0], [1], [0, 0, 1, 1], [], []>} : vector<28x28xf32>, vector<28x1xf32>, vector<28x1xf32> -> vector<28x1xf32>
    %158 = tpu.iota {dimensions = array<i32: 0>} : vector<2x1xi32>
    %c14_i32_53 = arith.constant 14 : i32
    %159 = vector.broadcast %c14_i32_53 : i32 to vector<2x1xi32>
    %160 = arith.muli %158, %159 : vector<2x1xi32>
    %161 = vector.broadcast %54 : vector<1x28xi32> to vector<2x28xi32>
    %162 = vector.broadcast %160 : vector<2x1xi32> to vector<2x28xi32>
    %163 = arith.cmpi sge, %161, %162 : vector<2x28xi32>
    %c1_i32_54 = arith.constant 1 : i32
    %164 = vector.broadcast %c1_i32_54 : i32 to vector<2x1xi32>
    %165 = arith.addi %158, %164 : vector<2x1xi32>
    %c14_i32_55 = arith.constant 14 : i32
    %166 = vector.broadcast %c14_i32_55 : i32 to vector<2x1xi32>
    %167 = arith.muli %165, %166 : vector<2x1xi32>
    %168 = vector.broadcast %54 : vector<1x28xi32> to vector<2x28xi32>
    %169 = vector.broadcast %167 : vector<2x1xi32> to vector<2x28xi32>
    %170 = arith.cmpi slt, %168, %169 : vector<2x28xi32>
    %171 = arith.andi %163, %170 : vector<2x28xi1>
    %cst_56 = arith.constant 1.000000e+00 : f32
    %cst_57 = arith.constant 0.000000e+00 : f32
    %172 = vector.broadcast %cst_56 : f32 to vector<2x28xf32>
    %173 = vector.broadcast %cst_57 : f32 to vector<2x28xf32>
    %174 = arith.select %171, %172, %173 : vector<2x28xi1>, vector<2x28xf32>
    %175 = vector.broadcast %157 : vector<28x1xf32> to vector<28x32xf32>
    %176 = arith.mulf %175, %0 : vector<28x32xf32>
    %cst_58 = arith.constant dense<0.000000e+00> : vector<2x32xf32>
    %177 = tpu.matmul %174, %176, %cst_58 {dimension_numbers = #tpu.dot_dimension_numbers<[1], [0], [0], [1], [0, 0, 1, 1], [], []>} : vector<2x28xf32>, vector<28x32xf32>, vector<2x32xf32> -> vector<2x32xf32>
    %c0_59 = arith.constant 0 : index
    %c0_60 = arith.constant 0 : index
    %178 = vector.load %arg4[%c0_59, %c0_60] : memref<2x32xf32, #tpu.memory_space<vmem>>, vector<2x32xf32>
    tpu.vector_store %arg4[%c0_59, %c0_60], %177 {strides = array<i32>} : memref<2x32xf32, #tpu.memory_space<vmem>>, vector<2x32xf32>,
    return
  }
}

</mosaic_0001>

<llo_original>
// kernel: question_self_attention.1
$region0: #{question_self_attention.1}
  #allocation0 [shape = 'u32[]', space=smem, size = 0x4, offset = 0x4, fixed_abs, tag = 'smem constant byte address 0x4 - core index']
  #allocation1 [shape = 'u32[72,128]{1,0:T(1,128)}', space=vmem, size = 0x9000, scoped, tag = 'internal scratch']
  #allocation2 [shape = 'f32[1,1]{1,0:T(1,128)S(6)}', space=smem, size = 0x200, scoped, tag = 'scoped memory for question_self_attention.1']
  %s0 = inlined_call_operand.vmem [shape: f32[28,32], index: 0, kind: input, shape index: {}]
  %s1 = inlined_call_operand.vmem [shape: f32[32,32], index: 1, kind: input, shape index: {}]
  %s2 = inlined_call_operand.vmem [shape: f32[2,32], index: 2, kind: input, shape index: {}]
  %s3 = inlined_call_operand.<no memory space> [shape: f32[1,1], index: 3, kind: input, shape index: {}]
  %s4 = inlined_call_operand.hbm [shape: f32[2,32], index: 4, kind: output, shape index: {}]
  %s5 = sld [smem:[#allocation0]]
  $region26: #{question_self_attention.1} parent=0
    _
  %s7 = ssub.s32 1, %s5
  %s8 = scalar_select 0, %s7, %s5
  %9 = sst [smem:[#allocation2]] %s3
  $region1: #{question_self_attention.1} parent=0
    #allocation3 [shape = 'u8[1024]{0}', space=vmem, size = 0x400, scoped, tag = 'output window, operand 0, single buffered']
    #allocation4 [shape = 's32[1]{0}', space=sflag, size = 0x4, scoped, tag = 'scoped memory for question_self_attention.1']
    %10 = vsyncpa [#allocation4], 0
    // Predicated region
    $region2: #{question_self_attention.1} parent=1 // pred_check
      _
    $region3: #{question_self_attention.1} parent=1 // pred_check_branch
      %12 = sbr.rel (0) target = $region5
    $region4: #{question_self_attention.1} parent=1 // pred_region
      _
    $region5: #{question_self_attention.1} parent=1 // pred_fallthru
      _
    // Predicated region
    $region6: #{question_self_attention.1} parent=1 // pred_check
      _
    $region7: #{question_self_attention.1} parent=1 // pred_check_branch
      %14 = sbr.rel (0) target = $region9
    $region8: #{question_self_attention.1} parent=1 // pred_region
      _
    $region9: #{question_self_attention.1} parent=1 // pred_fallthru
      _
    // Predicated region
    $region10: #{question_self_attention.1} parent=1 // pred_check
      _
    $region11: #{question_self_attention.1} parent=1 // pred_check_branch
      %16 = sbr.rel (0) target = $region13
    $region12: #{question_self_attention.1} parent=1 // pred_region
      _
    $region13: #{question_self_attention.1} parent=1 // pred_fallthru
      _
    // Predicated region
    $region14: #{question_self_attention.1} parent=1 // pred_check
      _
    $region15: #{question_self_attention.1} parent=1 // pred_check_branch
      %18 = sbr.rel (0) target = $region17
    $region16: #{question_self_attention.1} parent=1 // pred_region
      _
    $region17: #{question_self_attention.1} parent=1 // pred_fallthru
      _
    %v19 = vld [vmem:[%s0] sm:$0xff]
    %v20 = vld [vmem:[%s0 + $0x8] sm:$0xff]
    %v21 = vld [vmem:[%s0 + $0x10] sm:$0xff]
    %v22 = vld [vmem:[%s0 + $0x18] sm:$0xf]
    %v23 = vld [vmem:[%s2] sm:$0x1]
    %v24 = vld [vmem:[%s2 + $0x1] sm:$0x1]
    %s25 = sld [smem:[#allocation2]]
    %v26 = vld [vmem:[%s1] sm:$0xff]
    %v27 = vld [vmem:[%s1 + $0x8] sm:$0xff]
    %v28 = vld [vmem:[%s1 + $0x10] sm:$0xff]
    %v29 = vld [vmem:[%s1 + $0x18] sm:$0xff]
    %v30 = vperm.slane %v23, 0
    %vm31 = vcmask 261120
    %v33 = vsel %vm31, %v19, 0
    %v36 = vsel %vm31, %v20, 0
    %v39 = vsel %vm31, %v21, 0
    %v42 = vsel %vm31, %v22, 0
    %44 = vmatpush.msra.mxu0 0.0
    %45 = vmatpush.msra.mxu0 0.0
    %46 = vmatpush.msra.mxu0 0.0
    %47 = vmatpush.msra.mxu0 0.0
    %48 = vmatpush.msra.mxu0 0.0
    %49 = vmatpush.msra.mxu0 0.0
    %50 = vmatpush.msra.mxu0 0.0
    %51 = vmatpush.msra.mxu0 0.0
    %52 = vmatpush.msra.mxu0 0.0
    %53 = vmatpush.msra.mxu0 0.0
    %54 = vmatpush.msra.mxu0 0.0
    %55 = vmatpush.msra.mxu0 0.0
    %56 = vmatpush.msra.mxu0 %v29
    %57 = vmatpush.msra.mxu0 %v28
    %58 = vmatpush.msra.mxu0 %v27
    %59 = vmatpush.msra.mxu0 %v26
    %60 = vmatmul.f32.gmra.mxu0 %v33
    %v61 = vpop.f32.mrf.mxu0
    %v62 = vadd.f32 %v30, %v61
    %63 = vmatmul.f32.gmra.mxu0 %v36
    %v64 = vpop.f32.mrf.mxu0
    %v65 = vadd.f32 %v30, %v64
    %66 = vmatmul.f32.gmra.mxu0 %v39
    %v67 = vpop.f32.mrf.mxu0
    %v68 = vadd.f32 %v30, %v67
    %69 = vmatmul.f32.gmra.mxu0 %v42
    %v70 = vpop.f32.mrf.mxu0
    %v71 = vadd.f32 %v30, %v70
    %72 = vdwg.mxu0
    %v73 = vtanh.pop %v62
    %v74 = vtanh.pop %v65
    %v75 = vtanh.pop %v68
    %v76 = vtanh.pop %v71
    %v77 = vperm.slane %v24, 0
    %v78 = vmul.f32 %v73, %v77
    %v79 = vmul.f32 %v74, %v77
    %v80 = vmul.f32 %v75, %v77
    %v81 = vmul.f32 %v76, %v77
    %v82 = vsel %vm31, %v78, 0.0
    %83 = vadd.xlane.f32.xlu0 %v82
    %v84 = vpop.xlane.xlu0 %83
    %v85 = vsel %vm31, %v79, 0.0
    %86 = vadd.xlane.f32.xlu0 %v85
    %v87 = vpop.xlane.xlu0 %86
    %v88 = vsel %vm31, %v80, 0.0
    %89 = vadd.xlane.f32.xlu0 %v88
    %v90 = vpop.xlane.xlu0 %89
    %vm91 = vcmask 257024
    %v92 = vsel %vm91, %v81, 0.0
    %93 = vadd.xlane.f32.xlu0 %v92
    %v94 = vpop.xlane.xlu0 %93
    %v95 = vstv %s25
    %v96 = vadd.f32 %v84, %v95
    %v97 = vadd.f32 %v87, %v95
    %v98 = vadd.f32 %v90, %v95
    %v99 = vadd.f32 %v94, %v95
    %v100 = vlaneseq
    %v101 = vshrl.u32 %v100, 7
    %v102 = vadd.s32 %v101, 8
    %v103 = vadd.s32 %v101, 16
    %v104 = vadd.s32 %v101, 24
    %v105 = vlaneseq
    %v106 = vand.u32 %v105, 127
    %v107 = vsub.s32 %v101, %v106
    %v108 = vsub.s32 %v102, %v106
    %v109 = vsub.s32 %v103, %v106
    %v110 = vsub.s32 %v104, %v106
    %vm111 = vcmp.eq.s32.totalorder %v107, 0
    %vm112 = vcmp.eq.s32.totalorder %v108, 0
    %vm113 = vcmp.eq.s32.totalorder %v109, 0
    %vm114 = vcmp.eq.s32.totalorder %v110, 0
    %vm115 = vcmp.eq.s32.totalorder %v107, 14
    %vm116 = vcmp.eq.s32.totalorder %v108, 14
    %vm117 = vcmp.eq.s32.totalorder %v109, 14
    %vm118 = vcmp.eq.s32.totalorder %v110, 14
    %vm119 = vmor %vm111, %vm115
    %vm120 = vmor %vm112, %vm116
    %vm121 = vmor %vm113, %vm117
    %vm122 = vmor %vm114, %vm118
    %v123 = vsel %vm119, 1.0, 0.0
    %v124 = vsel %vm120, 1.0, 0.0
    %v125 = vsel %vm121, 1.0, 0.0
    %v126 = vsel %vm122, 1.0, 0.0
    %v127 = vsel %vm119, %v96, -inf
    %v128 = vsel %vm120, %v97, -inf
    %v129 = vsel %vm121, %v98, -inf
    %v130 = vsel %vm122, %v99, -inf
    %vm131 = vcmask 113664
    %v132 = vsel %vm131, %v127, -inf
    %v133 = vsel %vm131, %v128, -inf
    %v134 = vsel %vm131, %v129, -inf
    %vm135 = vcmask 109568
    %v136 = vsel %vm135, %v130, -inf
    %v137 = vmax.f32 %v132, %v133
    %v138 = vmax.f32 %v134, %v136
    %v139 = vmax.f32 %v137, %v138
    %v140 = vrot.slane %v139, 4
    %v141 = vmax.f32 %v139, %v140
    %v142 = vrot.slane %v141, 2
    %v143 = vmax.f32 %v141, %v142
    %v144 = vrot.slane %v143, 1
    %v145 = vmax.f32 %v143, %v144
    %v146 = vmul.f32 %v123, %v145
    %v147 = vmul.f32 %v124, %v145
    %v148 = vmul.f32 %v125, %v145
    %v149 = vmul.f32 %v126, %v145
    %v150 = vsel %vm131, %v146, 0.0
    %151 = vadd.xlane.f32.xlu0 %v150
    %v152 = vpop.xlane.xlu0 %151
    %v153 = vsel %vm131, %v147, 0.0
    %154 = vadd.xlane.f32.xlu0 %v153
    %v155 = vpop.xlane.xlu0 %154
    %v156 = vsel %vm131, %v148, 0.0
    %157 = vadd.xlane.f32.xlu0 %v156
    %v158 = vpop.xlane.xlu0 %157
    %v159 = vsel %vm135, %v149, 0.0
    %160 = vadd.xlane.f32.xlu0 %v159
    %v161 = vpop.xlane.xlu0 %160
    %v162 = vsub.f32 %v96, %v152
    %v163 = vsub.f32 %v97, %v155
    %v164 = vsub.f32 %v98, %v158
    %v165 = vsub.f32 %v99, %v161
    %v166 = vmul.f32 %v162, 1.442695
    %v167 = vpow.pop %v166
    %v168 = vmul.f32 %v163, 1.442695
    %v169 = vpow.pop %v168
    %v170 = vmul.f32 %v164, 1.442695
    %v171 = vpow.pop %v170
    %v172 = vmul.f32 %v165, 1.442695
    %v173 = vpow.pop %v172
    %v174 = vmul.f32 %v123, %v167
    %v175 = vmul.f32 %v124, %v169
    %v176 = vmul.f32 %v125, %v171
    %v177 = vmul.f32 %v126, %v173
    %v178 = vsel %vm131, %v174, 0.0
    %v179 = vsel %vm131, %v175, 0.0
    %v180 = vadd.f32 %v178, %v179
    %v181 = vsel %vm131, %v176, 0.0
    %v182 = vadd.f32 %v180, %v181
    %v183 = vsel %vm135, %v177, 0.0
    %v184 = vadd.f32 %v182, %v183
    %v185 = vrot.slane %v184, 4
    %v186 = vadd.f32 %v184, %v185
    %v187 = vrot.slane %v186, 2
    %v188 = vadd.f32 %v186, %v187
    %v189 = vrot.slane %v188, 1
    %v190 = vadd.f32 %v188, %v189
    %v191 = vmul.f32 %v123, %v190
    %v192 = vmul.f32 %v124, %v190
    %v193 = vmul.f32 %v125, %v190
    %v194 = vmul.f32 %v126, %v190
    %v195 = vsel %vm131, %v191, 0.0
    %196 = vadd.xlane.f32.xlu0 %v195
    %v197 = vpop.xlane.xlu0 %196
    %v198 = vsel %vm131, %v192, 0.0
    %199 = vadd.xlane.f32.xlu0 %v198
    %v200 = vpop.xlane.xlu0 %199
    %v201 = vsel %vm131, %v193, 0.0
    %202 = vadd.xlane.f32.xlu0 %v201
    %v203 = vpop.xlane.xlu0 %202
    %v204 = vsel %vm135, %v194, 0.0
    %205 = vadd.xlane.f32.xlu0 %v204
    %v206 = vpop.xlane.xlu0 %205
    %v207 = vrcp.pop %v197
    %v208 = vrcp.pop %v200
    %v209 = vrcp.pop %v203
    %v210 = vrcp.pop %v206
    %v211 = vmul.f32 %v197, %v207
    %v212 = vmul.f32 %v200, %v208
    %v213 = vmul.f32 %v203, %v209
    %v214 = vmul.f32 %v206, %v210
    %v215 = vsub.f32 2.0, %v211
    %v216 = vsub.f32 2.0, %v212
    %v217 = vsub.f32 2.0, %v213
    %v218 = vsub.f32 2.0, %v214
    %v219 = vmul.f32 %v207, %v215
    %v220 = vmul.f32 %v208, %v216
    %v221 = vmul.f32 %v209, %v217
    %v222 = vmul.f32 %v210, %v218
    %v223 = vmul.f32 %v167, %v219
    %v224 = vmul.f32 %v169, %v220
    %v225 = vmul.f32 %v171, %v221
    %v226 = vmul.f32 %v173, %v222
    %vm227 = vcmp.ge.s32.totalorder %v101, 2
    %vm228 = vcmp.ge.s32.totalorder %v102, 2
    %vm229 = vcmp.ge.s32.totalorder %v103, 2
    %vm230 = vcmp.ge.s32.totalorder %v104, 2
    %v231 = vsel %vm227, 1, 0
    %v232 = vsel %vm228, 1, 0
    %v233 = vsel %vm229, 1, 0
    %v234 = vsel %vm230, 1, 0
    %vm235 = vcmp.ge.s32.totalorder %v101, 4
    %vm236 = vcmp.ge.s32.totalorder %v102, 4
    %vm237 = vcmp.ge.s32.totalorder %v103, 4
    %vm238 = vcmp.ge.s32.totalorder %v104, 4
    %v239 = vsel %vm235, 1, 0
    %v240 = vsel %vm236, 1, 0
    %v241 = vsel %vm237, 1, 0
    %v242 = vsel %vm238, 1, 0
    %v243 = vadd.s32 %v231, %v239
    %v244 = vadd.s32 %v232, %v240
    %v245 = vadd.s32 %v233, %v241
    %v246 = vadd.s32 %v234, %v242
    %vm247 = vcmp.ge.s32.totalorder %v101, 6
    %vm248 = vcmp.ge.s32.totalorder %v102, 6
    %vm249 = vcmp.ge.s32.totalorder %v103, 6
    %vm250 = vcmp.ge.s32.totalorder %v104, 6
    %v251 = vsel %vm247, 1, 0
    %v252 = vsel %vm248, 1, 0
    %v253 = vsel %vm249, 1, 0
    %v254 = vsel %vm250, 1, 0
    %v255 = vadd.s32 %v243, %v251
    %v256 = vadd.s32 %v244, %v252
    %v257 = vadd.s32 %v245, %v253
    %v258 = vadd.s32 %v246, %v254
    %vm259 = vcmp.ge.s32.totalorder %v101, 8
    %vm260 = vcmp.ge.s32.totalorder %v102, 8
    %vm261 = vcmp.ge.s32.totalorder %v103, 8
    %vm262 = vcmp.ge.s32.totalorder %v104, 8
    %v263 = vsel %vm259, 1, 0
    %v264 = vsel %vm260, 1, 0
    %v265 = vsel %vm261, 1, 0
    %v266 = vsel %vm262, 1, 0
    %v267 = vadd.s32 %v255, %v263
    %v268 = vadd.s32 %v256, %v264
    %v269 = vadd.s32 %v257, %v265
    %v270 = vadd.s32 %v258, %v266
    %vm271 = vcmp.ge.s32.totalorder %v101, 10
    %vm272 = vcmp.ge.s32.totalorder %v102, 10
    %vm273 = vcmp.ge.s32.totalorder %v103, 10
    %vm274 = vcmp.ge.s32.totalorder %v104, 10
    %v275 = vsel %vm271, 1, 0
    %v276 = vsel %vm272, 1, 0
    %v277 = vsel %vm273, 1, 0
    %v278 = vsel %vm274, 1, 0
    %v279 = vadd.s32 %v267, %v275
    %v280 = vadd.s32 %v268, %v276
    %v281 = vadd.s32 %v269, %v277
    %v282 = vadd.s32 %v270, %v278
    %vm283 = vcmp.ge.s32.totalorder %v101, 12
    %vm284 = vcmp.ge.s32.totalorder %v102, 12
    %vm285 = vcmp.ge.s32.totalorder %v103, 12
    %vm286 = vcmp.ge.s32.totalorder %v104, 12
    %v287 = vsel %vm283, 1, 0
    %v288 = vsel %vm284, 1, 0
    %v289 = vsel %vm285, 1, 0
    %v290 = vsel %vm286, 1, 0
    %v291 = vadd.s32 %v279, %v287
    %v292 = vadd.s32 %v280, %v288
    %v293 = vadd.s32 %v281, %v289
    %v294 = vadd.s32 %v282, %v290
    %vm295 = vcmp.ge.s32.totalorder %v101, 14
    %vm296 = vcmp.ge.s32.totalorder %v102, 14
    %vm297 = vcmp.ge.s32.totalorder %v103, 14
    %vm298 = vcmp.ge.s32.totalorder %v104, 14
    %v299 = vsel %vm295, 1, 0
    %v300 = vsel %vm296, 1, 0
    %v301 = vsel %vm297, 1, 0
    %v302 = vsel %vm298, 1, 0
    %v303 = vadd.s32 %v291, %v299
    %v304 = vadd.s32 %v292, %v300
    %v305 = vadd.s32 %v293, %v301
    %v306 = vadd.s32 %v294, %v302
    %vm307 = vcmp.ge.s32.totalorder %v101, 16
    %vm308 = vcmp.ge.s32.totalorder %v102, 16
    %vm309 = vcmp.ge.s32.totalorder %v103, 16
    %vm310 = vcmp.ge.s32.totalorder %v104, 16
    %v311 = vsel %vm307, 1, 0
    %v312 = vsel %vm308, 1, 0
    %v313 = vsel %vm309, 1, 0
    %v314 = vsel %vm310, 1, 0
    %v315 = vadd.s32 %v303, %v311
    %v316 = vadd.s32 %v304, %v312
    %v317 = vadd.s32 %v305, %v313
    %v318 = vadd.s32 %v306, %v314
    %vm319 = vcmp.ge.s32.totalorder %v101, 18
    %vm320 = vcmp.ge.s32.totalorder %v102, 18
    %vm321 = vcmp.ge.s32.totalorder %v103, 18
    %vm322 = vcmp.ge.s32.totalorder %v104, 18
    %v323 = vsel %vm319, 1, 0
    %v324 = vsel %vm320, 1, 0
    %v325 = vsel %vm321, 1, 0
    %v326 = vsel %vm322, 1, 0
    %v327 = vadd.s32 %v315, %v323
    %v328 = vadd.s32 %v316, %v324
    %v329 = vadd.s32 %v317, %v325
    %v330 = vadd.s32 %v318, %v326
    %vm331 = vcmp.ge.s32.totalorder %v101, 20
    %vm332 = vcmp.ge.s32.totalorder %v102, 20
    %vm333 = vcmp.ge.s32.totalorder %v103, 20
    %vm334 = vcmp.ge.s32.totalorder %v104, 20
    %v335 = vsel %vm331, 1, 0
    %v336 = vsel %vm332, 1, 0
    %v337 = vsel %vm333, 1, 0
    %v338 = vsel %vm334, 1, 0
    %v339 = vadd.s32 %v327, %v335
    %v340 = vadd.s32 %v328, %v336
    %v341 = vadd.s32 %v329, %v337
    %v342 = vadd.s32 %v330, %v338
    %vm343 = vcmp.ge.s32.totalorder %v101, 22
    %vm344 = vcmp.ge.s32.totalorder %v102, 22
    %vm345 = vcmp.ge.s32.totalorder %v103, 22
    %vm346 = vcmp.ge.s32.totalorder %v104, 22
    %v347 = vsel %vm343, 1, 0
    %v348 = vsel %vm344, 1, 0
    %v349 = vsel %vm345, 1, 0
    %v350 = vsel %vm346, 1, 0
    %v351 = vadd.s32 %v339, %v347
    %v352 = vadd.s32 %v340, %v348
    %v353 = vadd.s32 %v341, %v349
    %v354 = vadd.s32 %v342, %v350
    %vm355 = vcmp.ge.s32.totalorder %v101, 24
    %vm356 = vcmp.ge.s32.totalorder %v102, 24
    %vm357 = vcmp.ge.s32.totalorder %v103, 24
    %vm358 = vcmp.ge.s32.totalorder %v104, 24
    %v359 = vsel %vm355, 1, 0
    %v360 = vsel %vm356, 1, 0
    %v361 = vsel %vm357, 1, 0
    %v362 = vsel %vm358, 1, 0
    %v363 = vadd.s32 %v351, %v359
    %v364 = vadd.s32 %v352, %v360
    %v365 = vadd.s32 %v353, %v361
    %v366 = vadd.s32 %v354, %v362
    %vm367 = vcmp.ge.s32.totalorder %v101, 26
    %vm368 = vcmp.ge.s32.totalorder %v102, 26
    %vm369 = vcmp.ge.s32.totalorder %v103, 26
    %vm370 = vcmp.ge.s32.totalorder %v104, 26
    %v371 = vsel %vm367, 1, 0
    %v372 = vsel %vm368, 1, 0
    %v373 = vsel %vm369, 1, 0
    %v374 = vsel %vm370, 1, 0
    %v375 = vadd.s32 %v363, %v371
    %v376 = vadd.s32 %v364, %v372
    %v377 = vadd.s32 %v365, %v373
    %v378 = vadd.s32 %v366, %v374
    %v379 = vmul.u32 %v375, 2
    %v380 = vmul.u32 %v376, 2
    %v381 = vmul.u32 %v377, 2
    %v382 = vmul.u32 %v378, 2
    %v383 = vsub.s32 %v101, %v379
    %v384 = vsub.s32 %v102, %v380
    %v385 = vsub.s32 %v103, %v381
    %v386 = vsub.s32 %v104, %v382
    %vm387 = vcmp.ge.s32.totalorder %v106, 14
    %v388 = vsel %vm387, 1, 0
    %v389 = vmul.u32 %v388, 14
    %v390 = vsub.s32 %v106, %v389
    %vm391 = vcmp.eq.s32.totalorder %v383, %v388
    %vm392 = vcmp.eq.s32.totalorder %v384, %v388
    %vm393 = vcmp.eq.s32.totalorder %v385, %v388
    %vm394 = vcmp.eq.s32.totalorder %v386, %v388
    %vm395 = vcmp.eq.s32.totalorder %v375, %v390
    %vm396 = vcmp.eq.s32.totalorder %v376, %v390
    %vm397 = vcmp.eq.s32.totalorder %v377, %v390
    %vm398 = vcmp.eq.s32.totalorder %v378, %v390
    %vm399 = vmand %vm391, %vm395
    %vm400 = vmand %vm392, %vm396
    %vm401 = vmand %vm393, %vm397
    %vm402 = vmand %vm394, %vm398
    %v403 = vsel %vm399, 1.0, 0.0
    %v404 = vsel %vm400, 1.0, 0.0
    %v405 = vsel %vm401, 1.0, 0.0
    %v406 = vsel %vm402, 1.0, 0.0
    %vm407 = vcmask 228352
    %v409 = vsel %vm407, %v403, 0
    %v412 = vsel %vm407, %v404, 0
    %v415 = vsel %vm407, %v405, 0
    %v418 = vsel %vm407, %v406, 0
    %vm420 = vcmask 1043456
    %v422 = vsel %vm420, %v226, 0
    %424 = vmatpush.msra.mxu0 0.0
    %425 = vmatpush.msra.mxu0 0.0
    %426 = vmatpush.msra.mxu0 0.0
    %427 = vmatpush.msra.mxu0 0.0
    %428 = vmatpush.msra.mxu0 0.0
    %429 = vmatpush.msra.mxu0 0.0
    %430 = vmatpush.msra.mxu0 0.0
    %431 = vmatpush.msra.mxu0 0.0
    %432 = vmatpush.msra.mxu0 0.0
    %433 = vmatpush.msra.mxu0 0.0
    %434 = vmatpush.msra.mxu0 0.0
    %435 = vmatpush.msra.mxu0 0.0
    %436 = vmatpush.msra.mxu0 %v422
    %437 = vmatpush.msra.mxu0 %v225
    %438 = vmatpush.msra.mxu0 %v224
    %439 = vmatpush.msra.mxu0 %v223
    %440 = vmatmul.f32.gmra.mxu0 %v409
    %v441 = vpop.f32.mrf.mxu0
    %v442 = vadd.f32 0.0, %v441
    %443 = vmatmul.f32.gmra.mxu0 %v412
    %v444 = vpop.f32.mrf.mxu0
    %v445 = vadd.f32 0.0, %v444
    %446 = vmatmul.f32.gmra.mxu0 %v415
    %v447 = vpop.f32.mrf.mxu0
    %v448 = vadd.f32 0.0, %v447
    %449 = vmatmul.f32.gmra.mxu0 %v418
    %v450 = vpop.f32.mrf.mxu0
    %v451 = vadd.f32 0.0, %v450
    %452 = vdwg.mxu0
    %v453 = vmul.u32 %v101, 14
    %vm454 = vcmp.ge.s32.totalorder %v106, %v453
    %v455 = vadd.s32 %v101, 1
    %v456 = vmul.u32 %v455, 14
    %vm457 = vcmp.lt.s32.totalorder %v106, %v456
    %vm458 = vmand %vm454, %vm457
    %v459 = vsel %vm458, 1.0, 0.0
    %461 = vset.pattern.permute.xlu0 0
    %462 = vperm.xlu0 %461, %v442
    %v463 = vpop.permute.xlu0 %462
    %466 = vset.pattern.permute.xlu0 0
    %467 = vperm.xlu0 %466, %v445
    %v468 = vpop.permute.xlu0 %467
    %471 = vset.pattern.permute.xlu0 0
    %472 = vperm.xlu0 %471, %v448
    %v473 = vpop.permute.xlu0 %472
    %476 = vset.pattern.permute.xlu0 0
    %477 = vperm.xlu0 %476, %v451
    %v478 = vpop.permute.xlu0 %477
    %v480 = vmul.f32 %v463, %v19
    %v481 = vmul.f32 %v468, %v20
    %v482 = vmul.f32 %v473, %v21
    %v483 = vmul.f32 %v478, %v22
    %v485 = vsel %vm407, %v459, 0
    %v488 = vsel %vm420, %v483, 0
    %490 = vmatpush.msra.mxu0 0.0
    %491 = vmatpush.msra.mxu0 0.0
    %492 = vmatpush.msra.mxu0 0.0
    %493 = vmatpush.msra.mxu0 0.0
    %494 = vmatpush.msra.mxu0 0.0
    %495 = vmatpush.msra.mxu0 0.0
    %496 = vmatpush.msra.mxu0 0.0
    %497 = vmatpush.msra.mxu0 0.0
    %498 = vmatpush.msra.mxu0 0.0
    %499 = vmatpush.msra.mxu0 0.0
    %500 = vmatpush.msra.mxu0 0.0
    %501 = vmatpush.msra.mxu0 0.0
    %502 = vmatpush.msra.mxu0 %v488
    %503 = vmatpush.msra.mxu0 %v482
    %504 = vmatpush.msra.mxu0 %v481
    %505 = vmatpush.msra.mxu0 %v480
    %506 = vmatmul.f32.gmra.mxu0 %v485
    %v507 = vpop.f32.mrf.mxu0
    %v508 = vadd.f32 0.0, %v507
    %509 = vdwg.mxu0
    %vm510 = vcmask 254976
    %511 = vst.msk [vmem:[#allocation3] sm:$0x3] %vm510, %v508
    // Predicated region
    $region18: #{question_self_attention.1} parent=1 // pred_check
      _
    $region19: #{question_self_attention.1} parent=1 // pred_check_branch
      %513 = sbr.rel (0) target = $region21
    $region20: #{question_self_attention.1} parent=1 // pred_region
      %515 = vsyncadd [#allocation4], 0
      %s517 = sshll.u32 [#allocation3], 4
      %s518 = int_to_ptr.vmem [resolvable:$true] %s517
      %s519 = sshll.u32 %s4, 4
      %s520 = int_to_ptr.hbm [resolvable:$true] %s519
      %522 = dma.vmem_to_hbm [thread:$0]  %s518, 32, %s520, [#allocation4]
    $region21: #{question_self_attention.1} parent=1 // pred_fallthru
      _
    // Predicated region
    $region22: #{question_self_attention.1} parent=1 // pred_check
      _
    $region23: #{question_self_attention.1} parent=1 // pred_check_branch
      %524 = sbr.rel (0) target = $region25
    $region24: #{question_self_attention.1} parent=1 // pred_region
      %526 = dma.done [#allocation4], 32
    $region25: #{question_self_attention.1} parent=1 // pred_fallthru
      _
    %527 = vsyncpa [#allocation4], 1

</llo_original>
